<compile_context>
chip_gen: v7x
topology: tpu7x:2x2x1
jax: 0.10.0
libtpu: 0.0.40
codegen_flags: <defaults>
</compile_context>

<pallas_src>
import functools
import numpy as np
import jax
import jax.numpy as jnp
from jax.experimental import pallas as pl
from jax.experimental.pallas import tpu as pltpu

EPS = 1e-5
_VMEM_LIMIT = 48 * 1024 * 1024   # > 16/32 MiB scoped defaults, < v7x 64 MiB physical


# ----------------------------------------------------------------------------
# Row-tile selection: largest divisor th of Ho with th*Wo <= ~target rows and
# (th*Wo) % 8 == 0 (sublane-aligned output blocks).
# ----------------------------------------------------------------------------
def _choose_th(Ho, Wo, target_rows=1024):
    th0 = max(1, min(Ho, max(1, target_rows // max(Wo, 1))))
    for cand in range(th0, 0, -1):
        if Ho % cand == 0 and (cand * Wo) % 8 == 0:
            return cand
    return None   # caller falls back to a single whole-M output block


# ----------------------------------------------------------------------------
# Shared conv helper: accumulate per-(input, tap) dots for one row-tile.
# x_refs[i] is the halo-padded NHWC input of the current sample (block (1,Hp,Wp,Ci)).
# ----------------------------------------------------------------------------
def _accum_conv_tile(x_refs, w_ref, cins, kh, kw, th, Wo, t, C):
    tm = th * Wo
    hwin = th + kh - 1
    h0 = t * th
    y = jnp.zeros((tm, C), jnp.float32)
    base = 0
    for i, ci in enumerate(cins):
        xw = x_refs[i][0, pl.ds(h0, hwin), :, :]          # (hwin, Wp, ci) bf16 window
        for dy in range(kh):
            for dx in range(kw):
                a = xw[dy:dy + th, dx:dx + Wo, :].reshape(tm, ci)
                r0 = base + (dy * kw + dx) * ci
                y = y + jnp.dot(a, w_ref[r0:r0 + ci, :],
                                preferred_element_type=jnp.float32)
        base += kh * kw * ci
    return y


# ----------------------------------------------------------------------------
# Kernel 1: conv + IBNorm (training-mode BN half + per-sample IN half) + ReLU.
# grid = (phase, sample, row_tile).  Phase 0: stats accumulation; phase 1: apply.
# ----------------------------------------------------------------------------
def _make_ibn_kernel(cins, kh, kw, th, Ho, Wo, C, tiled_out):
    n_in = len(cins)
    tm = th * Wo
    Ms = float(Ho * Wo)                       # per-sample element count

    def kernel(*refs):
        x_refs = refs[:n_in]
        w_ref, g_ref, b_ref, mask_ref = refs[n_in:n_in + 4]
        o_ref = refs[n_in + 4]
        sum_ref, sq_ref = refs[n_in + 5], refs[n_in + 6]

        p = pl.program_id(0)
        n = pl.program_id(1)
        t = pl.program_id(2)

        @pl.when((p == 0) & (n == 0) & (t == 0))
        def _():
            sum_ref[...] = jnp.zeros_like(sum_ref)
            sq_ref[...] = jnp.zeros_like(sq_ref)

        # Conv for this tile (recomputed in both phases; inputs/weights are VMEM-resident,
        # so the recompute costs no extra HBM traffic and the MXU has plenty of slack).
        y = _accum_conv_tile(x_refs, w_ref, cins, kh, kw, th, Wo, t, C)

        @pl.when(p == 0)      # accumulate exact per-sample sum / sumsq
        def _():
            sum_ref[n] = sum_ref[n] + jnp.sum(y, axis=0, keepdims=True)
            sq_ref[n] = sq_ref[n] + jnp.sum(y * y, axis=0, keepdims=True)

        @pl.when(p == 1)      # normalize (BN half: batch stats; IN half: sample stats), ReLU
        def _():
            nsamp = pl.num_programs(1)
            s_n, q_n = sum_ref[n], sq_ref[n]                    # (1, C)
            m_in = s_n / Ms
            v_in = jnp.maximum(q_n / Ms - m_in * m_in, 0.0)
            s_all = jnp.sum(sum_ref[...], axis=0)               # (1, C)
            q_all = jnp.sum(sq_ref[...], axis=0)
            cnt = Ms * nsamp
            m_bn = s_all / cnt
            v_bn = jnp.maximum(q_all / cnt - m_bn * m_bn, 0.0)
            mask = mask_ref[...]                                 # 1.0 on BN channels
            mean = jnp.where(mask > 0.5, m_bn, m_in)
            var = jnp.where(mask > 0.5, v_bn, v_in)
            scale = g_ref[...] * jax.lax.rsqrt(var + EPS)        # gamma==1 on IN half
            shift = b_ref[...] - mean * scale                    # beta==0 on IN half
            out = jnp.maximum(y * scale + shift, 0.0).astype(o_ref.dtype)
            if tiled_out:
                o_ref[...] = out
            else:
                row0 = (n * Ho + t * th) * Wo
                o_ref[pl.ds(row0, tm), :] = out

    return kernel


# ----------------------------------------------------------------------------
# Kernel 2: conv + bias + activation (relu / sigmoid / none), no norm.
# grid = (sample, row_tile), both axes independent ("parallel").
# ----------------------------------------------------------------------------
def _make_plain_kernel(cins, kh, kw, th, Ho, Wo, C, act, tiled_out):
    n_in = len(cins)
    tm = th * Wo

    def kernel(*refs):
        x_refs = refs[:n_in]
        w_ref, b_ref = refs[n_in], refs[n_in + 1]
        o_ref = refs[n_in + 2]
        n = pl.program_id(0)
        t = pl.program_id(1)
        y = _accum_conv_tile(x_refs, w_ref, cins, kh, kw, th, Wo, t, C) + b_ref[...]
        if act == "relu":
            y = jnp.maximum(y, 0.0)
        elif act == "sigmoid":
            y = jax.nn.sigmoid(y)
        out = y.astype(o_ref.dtype)
        if tiled_out:
            o_ref[...] = out
        else:
            row0 = (n * Ho + t * th) * Wo
            o_ref[pl.ds(row0, tm), :] = out

    return kernel


# ----------------------------------------------------------------------------
# Conv2dIBNormRelu block wrapper: takes a LIST of NHWC inputs (implicit channel concat
# handled as split-K accumulation inside the kernel) and runs one fused pallas_call.
# ----------------------------------------------------------------------------
def conv_block(xs, p, kernel_size, stride, padding, with_ibn=True, act="relu"):
    if not isinstance(xs, (list, tuple)):
        xs = [xs]
    N, H, W = xs[0].shape[:3]

    if stride == 1:
        kh = kw = kernel_size
        Ho = H + 2 * padding - kh + 1
        Wo = W + 2 * padding - kw + 1
        xs_p = []
        for a in xs:
            a = a.astype(jnp.bfloat16)
            if padding:
                a = jnp.pad(a, ((0, 0), (padding, padding), (padding, padding), (0, 0)))
            xs_p.append(a)
    else:
        # TODO(synk): fold strided taps into the kernel; only conv_enc2x (3x3 s2) hits this.
        x = (xs[0].astype(jnp.bfloat16) if len(xs) == 1 else
             jnp.concatenate([a.astype(jnp.bfloat16) for a in xs], axis=-1))
        k0 = kernel_size
        Ho = (H + 2 * padding - k0) // stride + 1
        Wo = (W + 2 * padding - k0) // stride + 1
        xp = jnp.pad(x, ((0, 0), (padding, padding), (padding, padding), (0, 0)))
        patches = [xp[:, dy:dy + stride * Ho:stride, dx:dx + stride * Wo:stride, :]
                   for dy in range(k0) for dx in range(k0)]
        xs_p = [jnp.concatenate(patches, axis=-1)]
        kh = kw = 1

    cins = [a.shape[-1] for a in xs_p]
    C = p['w'].shape[1]
    M = N * Ho * Wo

    th = _choose_th(Ho, Wo)
    tiled_out = th is not None
    if not tiled_out:
        th = Ho
    HT = Ho // th
    out_block_rows = th * Wo if tiled_out else M

    if with_ibn:
        x_specs = [pl.BlockSpec((1,) + a.shape[1:], lambda pp, n, t: (n, 0, 0, 0))
                   for a in xs_p]
        out_idx = (lambda pp, n, t: (n * HT + t, 0)) if tiled_out else \
                  (lambda pp, n, t: (0, 0))
        out = pl.pallas_call(
            _make_ibn_kernel(cins, kh, kw, th, Ho, Wo, C, tiled_out),
            out_shape=jax.ShapeDtypeStruct((M, C), jnp.bfloat16),
            grid=(2, N, HT),
            in_specs=x_specs + [
                pl.BlockSpec(p['w'].shape, lambda pp, n, t: (0, 0)),
                pl.BlockSpec((1, C), lambda pp, n, t: (0, 0)),
                pl.BlockSpec((1, C), lambda pp, n, t: (0, 0)),
                pl.BlockSpec((1, C), lambda pp, n, t: (0, 0)),
            ],
            out_specs=pl.BlockSpec((out_block_rows, C), out_idx),
            scratch_shapes=[pltpu.VMEM((N, 1, C), jnp.float32),
                            pltpu.VMEM((N, 1, C), jnp.float32)],
            compiler_params=pltpu.CompilerParams(
                dimension_semantics=("arbitrary", "arbitrary", "arbitrary"),
                vmem_limit_bytes=_VMEM_LIMIT),
        )(*xs_p, p['w'], p['gamma'], p['beta'], p['mask'])
    else:
        x_specs = [pl.BlockSpec((1,) + a.shape[1:], lambda n, t: (n, 0, 0, 0))
                   for a in xs_p]
        out_idx = (lambda n, t: (n * HT + t, 0)) if tiled_out else (lambda n, t: (0, 0))
        sem = ("parallel", "parallel") if tiled_out else ("arbitrary", "arbitrary")
        out = pl.pallas_call(
            _make_plain_kernel(cins, kh, kw, th, Ho, Wo, C, act, tiled_out),
            out_shape=jax.ShapeDtypeStruct((M, C), jnp.float32),
            grid=(N, HT),
            in_specs=x_specs + [
                pl.BlockSpec(p['w'].shape, lambda n, t: (0, 0)),
                pl.BlockSpec((1, C), lambda n, t: (0, 0)),
            ],
            out_specs=pl.BlockSpec((out_block_rows, C), out_idx),
            compiler_params=pltpu.CompilerParams(
                dimension_semantics=sem, vmem_limit_bytes=_VMEM_LIMIT),
        )(*xs_p, p['w'], p['b'])

    return out.reshape(N, Ho, Wo, C)


# ----------------------------------------------------------------------------
# Glue: bilinear resize matching F.interpolate(mode='bilinear', align_corners=False)
# ----------------------------------------------------------------------------
@functools.lru_cache(maxsize=None)
def _resize_matrix(in_size, out_size):
    scale = in_size / out_size
    mat = np.zeros((out_size, in_size), dtype=np.float32)
    for o in range(out_size):
        src = (o + 0.5) * scale - 0.5
        src = max(src, 0.0)
        i0 = min(int(np.floor(src)), in_size - 1)
        i1 = i0 + 1 if i0 < in_size - 1 else i0
        l1 = src - i0
        mat[o, i0] += 1.0 - l1
        mat[o, i1] += l1
    return jnp.asarray(mat)


def bilinear_resize(x, out_h, out_w):
    rh = _resize_matrix(x.shape[1], out_h)
    rw = _resize_matrix(x.shape[2], out_w)
    return jnp.einsum('oh,pw,nhwc->nopc', rh, rw, x)


# ----------------------------------------------------------------------------
# Parameter init: single flattened weight [kh*kw*Cin, Cout] (bf16).  For IBN blocks the
# conv bias is omitted (exactly cancelled by the BN/IN mean subtraction); gamma/beta are
# padded to full C with identity values on the InstanceNorm half.
# ----------------------------------------------------------------------------
def init_conv(key, cin, cout, k, with_ibn=True):
    kw_key, b_key = jax.random.split(key)
    fan_in = cin * k * k
    bound = 1.0 / np.sqrt(fan_in)
    w = jax.random.uniform(kw_key, (k * k * cin, cout), jnp.float32, -bound, bound)
    if with_ibn:
        cb = cout // 2
        mask = jnp.concatenate([jnp.ones((1, cb), jnp.float32),
                                jnp.zeros((1, cout - cb), jnp.float32)], axis=1)
        return {'w': w.astype(jnp.bfloat16),
                'gamma': jnp.ones((1, cout), jnp.float32),
                'beta': jnp.zeros((1, cout), jnp.float32),
                'mask': mask}
    b = jax.random.uniform(b_key, (cout,), jnp.float32, -bound, bound)
    return {'w': w.astype(jnp.bfloat16), 'b': b.reshape(1, cout).astype(jnp.float32)}


def init_hr_branch(key, hr, enc_channels):
    keys = jax.random.split(key, 13)
    return {
        'tohr_enc2x': init_conv(keys[0], enc_channels[0], hr, 1),
        'conv_enc2x': init_conv(keys[1], hr + 3, hr, 3),
        'tohr_enc4x': init_conv(keys[2], enc_channels[1], hr, 1),
        'conv_enc4x': init_conv(keys[3], 2 * hr, 2 * hr, 3),
        'conv_hr4x': [
            init_conv(keys[4], 3 * hr + 3, 2 * hr, 3),
            init_conv(keys[5], 2 * hr, 2 * hr, 3),
            init_conv(keys[6], 2 * hr, hr, 3),
        ],
        'conv_hr2x': [
            init_conv(keys[7], 2 * hr, 2 * hr, 3),
            init_conv(keys[8], 2 * hr, hr, 3),
            init_conv(keys[9], hr, hr, 3),
            init_conv(keys[10], hr, hr, 3),
        ],
        'conv_hr': [
            init_conv(keys[11], hr + 3, hr, 3),
            init_conv(keys[12], hr, 1, 1, with_ibn=False),
        ],
    }


# ----------------------------------------------------------------------------
# HRBranch forward (NHWC).  Channel concats become multi-input conv blocks (split-K).
# ----------------------------------------------------------------------------
def hr_branch_forward(params, img, enc2x, enc4x, lr8x, inference=False):
    N, H, W, _ = img.shape

    img2x = bilinear_resize(img, H // 2, W // 2)
    img4x = bilinear_resize(img, H // 4, W // 4)

    enc2x_t = conv_block([enc2x], params['tohr_enc2x'], 1, 1, 0)
    hr4x = conv_block([img2x, enc2x_t], params['conv_enc2x'], 3, 2, 1)

    enc4x_t = conv_block([enc4x], params['tohr_enc4x'], 1, 1, 0)
    hr4x = conv_block([hr4x, enc4x_t], params['conv_enc4x'], 3, 1, 1)

    lr4x = bilinear_resize(lr8x, H // 4, W // 4)
    x = conv_block([hr4x, lr4x, img4x], params['conv_hr4x'][0], 3, 1, 1)
    x = conv_block([x], params['conv_hr4x'][1], 3, 1, 1)
    hr4x = conv_block([x], params['conv_hr4x'][2], 3, 1, 1)

    hr2x_up = bilinear_resize(hr4x, H // 2, W // 2)
    x = conv_block([hr2x_up, enc2x_t], params['conv_hr2x'][0], 3, 1, 1)
    x = conv_block([x], params['conv_hr2x'][1], 3, 1, 1)
    x = conv_block([x], params['conv_hr2x'][2], 3, 1, 1)
    hr2x = conv_block([x], params['conv_hr2x'][3], 3, 1, 1)

    pred_detail = None
    if not inference:
        hr = bilinear_resize(hr2x, H, W)
        x = conv_block([hr, img], params['conv_hr'][0], 3, 1, 1)
        pred_detail = conv_block([x], params['conv_hr'][1], 1, 1, 0,
                                 with_ibn=False, act="sigmoid")

    return pred_detail, hr2x.astype(jnp.float32)


if __name__ == "__main__":
    hr_channels = 8
    enc_channels = (8, 8)

    key = jax.random.PRNGKey(0)
    k_param, k_img, k_e2, k_e4, k_lr = jax.random.split(key, 5)
    params = init_hr_branch(k_param, hr_channels, enc_channels)

    N, H, W = 2, 16, 16
    img = jax.random.normal(k_img, (N, H, W, 3), jnp.float32)
    enc2x = jax.random.normal(k_e2, (N, H // 2, W // 2, enc_channels[0]), jnp.float32)
    enc4x = jax.random.normal(k_e4, (N, H // 4, W // 4, enc_channels[1]), jnp.float32)
    lr8x = jax.random.normal(k_lr, (N, H // 8, W // 8, hr_channels), jnp.float32)

    pred_detail, hr2x = hr_branch_forward(params, img, enc2x, enc4x, lr8x,
                                          inference=False)
    jax.block_until_ready((pred_detail, hr2x))

    assert pred_detail.shape == (N, H, W, 1)
    assert hr2x.shape == (N, H // 2, W // 2, hr_channels)
    assert bool(jnp.all(jnp.isfinite(pred_detail))) and bool(jnp.all(jnp.isfinite(hr2x)))
    print("KERNEL_OK")
</pallas_src>

<mosaic_0001>
module attributes {stable_mosaic.version = 11 : i64} {
  func.func @kernel(%arg0: i32, %arg1: i32, %arg2: i32, %arg3: memref<1x8x8x8xbf16, #tpu.memory_space<vmem>>, %arg4: memref<8x8xbf16, #tpu.memory_space<vmem>>, %arg5: memref<1x8xf32, #tpu.memory_space<vmem>>, %arg6: memref<1x8xf32, #tpu.memory_space<vmem>>, %arg7: memref<1x8xf32, #tpu.memory_space<vmem>>, %arg8: memref<64x8xbf16, #tpu.memory_space<vmem>>, %arg9: memref<2x1x8xf32, #tpu.memory_space<vmem>>, %arg10: memref<2x1x8xf32, #tpu.memory_space<vmem>>) attributes {dimension_semantics = [#tpu.dimension_semantics<arbitrary>, #tpu.dimension_semantics<arbitrary>, #tpu.dimension_semantics<arbitrary>], iteration_bounds = array<i64: 2, 2, 1>, scalar_prefetch = 0 : i64, scratch_operands = 2 : i64, tpu.core_type = #tpu.core_type<tc>, window_params = [{transform_indices = @transform_0, window_bounds = array<i64: 1, 8, 8, 8>}, {pipeline_mode = #tpu.pipeline_mode<synchronous>, transform_indices = @transform_1, window_bounds = array<i64: 8, 8>}, {pipeline_mode = #tpu.pipeline_mode<synchronous>, transform_indices = @transform_2, window_bounds = array<i64: 1, 8>}, {pipeline_mode = #tpu.pipeline_mode<synchronous>, transform_indices = @transform_3, window_bounds = array<i64: 1, 8>}, {pipeline_mode = #tpu.pipeline_mode<synchronous>, transform_indices = @transform_4, window_bounds = array<i64: 1, 8>}, {transform_indices = @transform_5, window_bounds = array<i64: 64, 8>}]} {
    %c0_i32 = arith.constant 0 : i32
    %0 = arith.cmpi eq, %arg0, %c0_i32 : i32
    %c0_i32_0 = arith.constant 0 : i32
    %1 = arith.cmpi eq, %arg1, %c0_i32_0 : i32
    %2 = arith.andi %0, %1 : i1
    %c0_i32_1 = arith.constant 0 : i32
    %3 = arith.cmpi eq, %arg2, %c0_i32_1 : i32
    %4 = arith.andi %2, %3 : i1
    %5 = arith.extui %4 : i1 to i32
    %c0_i32_2 = arith.constant 0 : i32
    %6 = arith.cmpi ne, %5, %c0_i32_2 : i32
    scf.if %6 {
      %cst_11 = arith.constant 0.000000e+00 : f32
      %22 = vector.broadcast %cst_11 : f32 to vector<2x1x8xf32>
      %c0_12 = arith.constant 0 : index
      %c0_13 = arith.constant 0 : index
      %c0_14 = arith.constant 0 : index
      %23 = vector.load %arg9[%c0_12, %c0_13, %c0_14] : memref<2x1x8xf32, #tpu.memory_space<vmem>>, vector<2x1x8xf32>
      tpu.vector_store %arg9[%c0_12, %c0_13, %c0_14], %22 {strides = array<i32>} : memref<2x1x8xf32, #tpu.memory_space<vmem>>, vector<2x1x8xf32>,
      %cst_15 = arith.constant 0.000000e+00 : f32
      %24 = vector.broadcast %cst_15 : f32 to vector<2x1x8xf32>
      %c0_16 = arith.constant 0 : index
      %c0_17 = arith.constant 0 : index
      %c0_18 = arith.constant 0 : index
      %25 = vector.load %arg10[%c0_16, %c0_17, %c0_18] : memref<2x1x8xf32, #tpu.memory_space<vmem>>, vector<2x1x8xf32>
      tpu.vector_store %arg10[%c0_16, %c0_17, %c0_18], %24 {strides = array<i32>} : memref<2x1x8xf32, #tpu.memory_space<vmem>>, vector<2x1x8xf32>,
    } else {
    }
    %c8_i32 = arith.constant 8 : i32
    %7 = arith.muli %arg2, %c8_i32 : i32
    %cst = arith.constant 0.000000e+00 : f32
    %8 = vector.broadcast %cst : f32 to vector<64x8xf32>
    %c0 = arith.constant 0 : index
    %9 = arith.index_cast %7 : i32 to index
    %c0_3 = arith.constant 0 : index
    %c0_4 = arith.constant 0 : index
    %10 = vector.load %arg3[%c0, %9, %c0_3, %c0_4] : memref<1x8x8x8xbf16, #tpu.memory_space<vmem>>, vector<1x8x8x8xbf16>
    %11 = vector.shape_cast %10 : vector<1x8x8x8xbf16> to vector<8x8x8xbf16>
    %12 = vector.shape_cast %11 : vector<8x8x8xbf16> to vector<64x8xbf16>
    %c0_5 = arith.constant 0 : index
    %c0_6 = arith.constant 0 : index
    %13 = vector.load %arg4[%c0_5, %c0_6] : memref<8x8xbf16, #tpu.memory_space<vmem>>, vector<8x8xbf16>
    %cst_7 = arith.constant dense<0.000000e+00> : vector<64x8xf32>
    %14 = tpu.matmul %12, %13, %cst_7 {dimension_numbers = #tpu.dot_dimension_numbers<[1], [0], [0], [1], [0, 0, 1, 1], [], []>} : vector<64x8xbf16>, vector<8x8xbf16>, vector<64x8xf32> -> vector<64x8xf32>
    %15 = arith.addf %8, %14 : vector<64x8xf32>
    %c0_i32_8 = arith.constant 0 : i32
    %16 = arith.cmpi eq, %arg0, %c0_i32_8 : i32
    %17 = arith.extui %16 : i1 to i32
    %c0_i32_9 = arith.constant 0 : i32
    %18 = arith.cmpi ne, %17, %c0_i32_9 : i32
    scf.if %18 {
      %22 = arith.index_cast %arg1 : i32 to index
      %c0_11 = arith.constant 0 : index
      %c0_12 = arith.constant 0 : index
      %23 = vector.load %arg9[%22, %c0_11, %c0_12] : memref<2x1x8xf32, #tpu.memory_space<vmem>>, vector<1x1x8xf32>
      %24 = vector.shape_cast %23 : vector<1x1x8xf32> to vector<1x8xf32>
      %cst_13 = arith.constant dense<0.000000e+00> : vector<8xf32>
      %25 = vector.multi_reduction <add>, %15, %cst_13 [0] : vector<64x8xf32> to vector<8xf32>
      %26 = vector.shape_cast %25 : vector<8xf32> to vector<1x8xf32>
      %27 = arith.addf %24, %26 : vector<1x8xf32>
      %28 = arith.index_cast %arg1 : i32 to index
      %c0_14 = arith.constant 0 : index
      %c0_15 = arith.constant 0 : index
      %29 = vector.load %arg9[%28, %c0_14, %c0_15] : memref<2x1x8xf32, #tpu.memory_space<vmem>>, vector<1x1x8xf32>
      %30 = vector.shape_cast %29 : vector<1x1x8xf32> to vector<1x8xf32>
      %31 = vector.shape_cast %27 : vector<1x8xf32> to vector<1x1x8xf32>
      tpu.vector_store %arg9[%28, %c0_14, %c0_15], %31 {strides = array<i32>} : memref<2x1x8xf32, #tpu.memory_space<vmem>>, vector<1x1x8xf32>,
      %32 = arith.index_cast %arg1 : i32 to index
      %c0_16 = arith.constant 0 : index
      %c0_17 = arith.constant 0 : index
      %33 = vector.load %arg10[%32, %c0_16, %c0_17] : memref<2x1x8xf32, #tpu.memory_space<vmem>>, vector<1x1x8xf32>
      %34 = vector.shape_cast %33 : vector<1x1x8xf32> to vector<1x8xf32>
      %35 = arith.mulf %15, %15 : vector<64x8xf32>
      %cst_18 = arith.constant dense<0.000000e+00> : vector<8xf32>
      %36 = vector.multi_reduction <add>, %35, %cst_18 [0] : vector<64x8xf32> to vector<8xf32>
      %37 = vector.shape_cast %36 : vector<8xf32> to vector<1x8xf32>
      %38 = arith.addf %34, %37 : vector<1x8xf32>
      %39 = arith.index_cast %arg1 : i32 to index
      %c0_19 = arith.constant 0 : index
      %c0_20 = arith.constant 0 : index
      %40 = vector.load %arg10[%39, %c0_19, %c0_20] : memref<2x1x8xf32, #tpu.memory_space<vmem>>, vector<1x1x8xf32>
      %41 = vector.shape_cast %40 : vector<1x1x8xf32> to vector<1x8xf32>
      %42 = vector.shape_cast %38 : vector<1x8xf32> to vector<1x1x8xf32>
      tpu.vector_store %arg10[%39, %c0_19, %c0_20], %42 {strides = array<i32>} : memref<2x1x8xf32, #tpu.memory_space<vmem>>, vector<1x1x8xf32>,
    } else {
    }
    %c1_i32 = arith.constant 1 : i32
    %19 = arith.cmpi eq, %arg0, %c1_i32 : i32
    %20 = arith.extui %19 : i1 to i32
    %c0_i32_10 = arith.constant 0 : i32
    %21 = arith.cmpi ne, %20, %c0_i32_10 : i32
    scf.if %21 {
      %22 = arith.index_cast %arg1 : i32 to index
      %c0_11 = arith.constant 0 : index
      %c0_12 = arith.constant 0 : index
      %23 = vector.load %arg9[%22, %c0_11, %c0_12] : memref<2x1x8xf32, #tpu.memory_space<vmem>>, vector<1x1x8xf32>
      %24 = vector.shape_cast %23 : vector<1x1x8xf32> to vector<1x8xf32>
      %25 = arith.index_cast %arg1 : i32 to index
      %c0_13 = arith.constant 0 : index
      %c0_14 = arith.constant 0 : index
      %26 = vector.load %arg10[%25, %c0_13, %c0_14] : memref<2x1x8xf32, #tpu.memory_space<vmem>>, vector<1x1x8xf32>
      %27 = vector.shape_cast %26 : vector<1x1x8xf32> to vector<1x8xf32>
      %cst_15 = arith.constant 6.400000e+01 : f32
      %28 = vector.broadcast %cst_15 : f32 to vector<1x8xf32>
      %29 = arith.divf %24, %28 : vector<1x8xf32>
      %cst_16 = arith.constant 6.400000e+01 : f32
      %30 = vector.broadcast %cst_16 : f32 to vector<1x8xf32>
      %31 = arith.divf %27, %30 : vector<1x8xf32>
      %32 = arith.mulf %29, %29 : vector<1x8xf32>
      %33 = arith.subf %31, %32 : vector<1x8xf32>
      %cst_17 = arith.constant 0.000000e+00 : f32
      %34 = vector.broadcast %cst_17 : f32 to vector<1x8xf32>
      %35 = arith.maximumf %33, %34 : vector<1x8xf32>
      %c0_18 = arith.constant 0 : index
      %c0_19 = arith.constant 0 : index
      %c0_20 = arith.constant 0 : index
      %36 = vector.load %arg9[%c0_18, %c0_19, %c0_20] : memref<2x1x8xf32, #tpu.memory_space<vmem>>, vector<2x1x8xf32>
      %cst_21 = arith.constant dense<0.000000e+00> : vector<1x8xf32>
      %37 = vector.multi_reduction <add>, %36, %cst_21 [0] : vector<2x1x8xf32> to vector<1x8xf32>
      %c0_22 = arith.constant 0 : index
      %c0_23 = arith.constant 0 : index
      %c0_24 = arith.constant 0 : index
      %38 = vector.load %arg10[%c0_22, %c0_23, %c0_24] : memref<2x1x8xf32, #tpu.memory_space<vmem>>, vector<2x1x8xf32>
      %cst_25 = arith.constant dense<0.000000e+00> : vector<1x8xf32>
      %39 = vector.multi_reduction <add>, %38, %cst_25 [0] : vector<2x1x8xf32> to vector<1x8xf32>
      %cst_26 = arith.constant 1.280000e+02 : f32
      %40 = vector.broadcast %cst_26 : f32 to vector<1x8xf32>
      %41 = arith.divf %37, %40 : vector<1x8xf32>
      %cst_27 = arith.constant 1.280000e+02 : f32
      %42 = vector.broadcast %cst_27 : f32 to vector<1x8xf32>
      %43 = arith.divf %39, %42 : vector<1x8xf32>
      %44 = arith.mulf %41, %41 : vector<1x8xf32>
      %45 = arith.subf %43, %44 : vector<1x8xf32>
      %cst_28 = arith.constant 0.000000e+00 : f32
      %46 = vector.broadcast %cst_28 : f32 to vector<1x8xf32>
      %47 = arith.maximumf %45, %46 : vector<1x8xf32>
      %c0_29 = arith.constant 0 : index
      %c0_30 = arith.constant 0 : index
      %48 = vector.load %arg7[%c0_29, %c0_30] : memref<1x8xf32, #tpu.memory_space<vmem>>, vector<1x8xf32>
      %cst_31 = arith.constant 5.000000e-01 : f32
      %49 = vector.broadcast %cst_31 : f32 to vector<1x8xf32>
      %50 = arith.cmpf ogt, %48, %49 : vector<1x8xf32>
      %51 = arith.select %50, %41, %29 : vector<1x8xi1>, vector<1x8xf32>
      %cst_32 = arith.constant 5.000000e-01 : f32
      %52 = vector.broadcast %cst_32 : f32 to vector<1x8xf32>
      %53 = arith.cmpf ogt, %48, %52 : vector<1x8xf32>
      %54 = arith.select %53, %47, %35 : vector<1x8xi1>, vector<1x8xf32>
      %c0_33 = arith.constant 0 : index
      %c0_34 = arith.constant 0 : index
      %55 = vector.load %arg5[%c0_33, %c0_34] : memref<1x8xf32, #tpu.memory_space<vmem>>, vector<1x8xf32>
      %cst_35 = arith.constant 9.99999974E-6 : f32
      %56 = vector.broadcast %cst_35 : f32 to vector<1x8xf32>
      %57 = arith.addf %54, %56 : vector<1x8xf32>
      %58 = math.rsqrt %57 : vector<1x8xf32>
      %59 = arith.mulf %55, %58 : vector<1x8xf32>
      %c0_36 = arith.constant 0 : index
      %c0_37 = arith.constant 0 : index
      %60 = vector.load %arg6[%c0_36, %c0_37] : memref<1x8xf32, #tpu.memory_space<vmem>>, vector<1x8xf32>
      %61 = arith.mulf %51, %59 : vector<1x8xf32>
      %62 = arith.subf %60, %61 : vector<1x8xf32>
      %63 = vector.broadcast %59 : vector<1x8xf32> to vector<64x8xf32>
      %64 = arith.mulf %15, %63 : vector<64x8xf32>
      %65 = vector.broadcast %62 : vector<1x8xf32> to vector<64x8xf32>
      %66 = arith.addf %64, %65 : vector<64x8xf32>
      %cst_38 = arith.constant 0.000000e+00 : f32
      %67 = vector.broadcast %cst_38 : f32 to vector<64x8xf32>
      %68 = arith.maximumf %66, %67 : vector<64x8xf32>
      %69 = arith.truncf %68 : vector<64x8xf32> to vector<64x8xbf16>
      %c0_39 = arith.constant 0 : index
      %c0_40 = arith.constant 0 : index
      %70 = vector.load %arg8[%c0_39, %c0_40] : memref<64x8xbf16, #tpu.memory_space<vmem>>, vector<64x8xbf16>
      tpu.vector_store %arg8[%c0_39, %c0_40], %69 {strides = array<i32>} : memref<64x8xbf16, #tpu.memory_space<vmem>>, vector<64x8xbf16>,
    } else {
    }
    return
  }
  func.func @transform_0(%arg0: i32, %arg1: i32, %arg2: i32) -> (i32, i32, i32, i32) {
    %c0_i32 = arith.constant 0 : i32
    %c0_i32_0 = arith.constant 0 : i32
    %c0_i32_1 = arith.constant 0 : i32
    %c0_i32_2 = arith.constant 0 : i32
    return %arg1, %c0_i32, %c0_i32_0, %c0_i32_1 : i32, i32, i32, i32
  }
  func.func @transform_1(%arg0: i32, %arg1: i32, %arg2: i32) -> (i32, i32) {
    %c0_i32 = arith.constant 0 : i32
    %c0_i32_0 = arith.constant 0 : i32
    %c0_i32_1 = arith.constant 0 : i32
    return %c0_i32, %c0_i32_0 : i32, i32
  }
  func.func @transform_2(%arg0: i32, %arg1: i32, %arg2: i32) -> (i32, i32) {
    %c0_i32 = arith.constant 0 : i32
    %c0_i32_0 = arith.constant 0 : i32
    %c0_i32_1 = arith.constant 0 : i32
    return %c0_i32, %c0_i32_0 : i32, i32
  }
  func.func @transform_3(%arg0: i32, %arg1: i32, %arg2: i32) -> (i32, i32) {
    %c0_i32 = arith.constant 0 : i32
    %c0_i32_0 = arith.constant 0 : i32
    %c0_i32_1 = arith.constant 0 : i32
    return %c0_i32, %c0_i32_0 : i32, i32
  }
  func.func @transform_4(%arg0: i32, %arg1: i32, %arg2: i32) -> (i32, i32) {
    %c0_i32 = arith.constant 0 : i32
    %c0_i32_0 = arith.constant 0 : i32
    %c0_i32_1 = arith.constant 0 : i32
    return %c0_i32, %c0_i32_0 : i32, i32
  }
  func.func @transform_5(%arg0: i32, %arg1: i32, %arg2: i32) -> (i32, i32) {
    %c1_i32 = arith.constant 1 : i32
    %0 = arith.muli %arg1, %c1_i32 : i32
    %1 = arith.addi %0, %arg2 : i32
    %c0_i32 = arith.constant 0 : i32
    %c0_i32_0 = arith.constant 0 : i32
    return %1, %c0_i32 : i32, i32
  }
}

</mosaic_0001>

<llo_original>
// kernel: tpu_custom_call.1
$region0: #{tpu_custom_call.1}
  #allocation0 [shape = 'u32[]', space=smem, size = 0x4, offset = 0x4, fixed_abs, tag = 'smem constant byte address 0x4 - core index']
  #allocation1 [shape = 'u32[144,128]{1,0:T(1,128)}', space=vmem, size = 0x12000, scoped, tag = 'internal scratch']
  #allocation2 [shape = 'f32[2,1,8]{2,1,0:T(1,128)}', space=vmem, size = 0x400, scoped, tag = 'scratch operand']
  #allocation3 [shape = 'f32[2,1,8]{2,1,0:T(1,128)}', space=vmem, size = 0x400, scoped, tag = 'scratch operand']
  %s0 = inlined_call_operand.hbm [shape: bf16[2,8,8,8], index: 0, kind: input, shape index: {}]
  %s1 = inlined_call_operand.hbm [shape: bf16[8,8], index: 1, kind: input, shape index: {}]
  %s2 = inlined_call_operand.vmem [shape: f32[1,8], index: 2, kind: input, shape index: {}]
  %s3 = inlined_call_operand.vmem [shape: f32[1,8], index: 3, kind: input, shape index: {}]
  %s4 = inlined_call_operand.vmem [shape: f32[1,8], index: 4, kind: input, shape index: {}]
  %s5 = inlined_call_operand.vmem [shape: bf16[128,8], index: 5, kind: output, shape index: {}]
  %s6 = sld [smem:[#allocation0]]
  $region73: #{tpu_custom_call.1} parent=0
    _
  %s8 = ssub.s32 1, %s6
  %s9 = scalar_select 0, %s8, %s6
  $region1: #{tpu_custom_call.1} parent=0
    #allocation4 [shape = 'u8[32768]{0}', space=vmem, size = 0x8000, scoped, tag = 'input window, operand 0']
    #allocation5 [shape = 's32[2]{0}', space=sflag, size = 0x8, scoped, tag = 'scoped memory for tpu_custom_call.1']
    #allocation6 [shape = 'u8[2048]{0}', space=vmem, size = 0x800, scoped, tag = 'input window, operand 1, single buffered']
    #allocation7 [shape = 's32[1]{0}', space=sflag, size = 0x4, scoped, tag = 'scoped memory for tpu_custom_call.1']
    %10 = vsyncpa [#allocation5], 0
    %s11 = scalar_lea.sflag [#allocation5], 1
    %12 = vsyncpa %s11, 0
    %13 = vsyncpa [#allocation7], 0
    loop: start=0, step=1, limit=6
    $region2: #{tpu_custom_call.1} parent=1 // loop_pre_header
      _
    $region3: #{tpu_custom_call.1} parent=1 // loop_header
      %s15 = sphi 0, %s19
      %p16 = scmp.ge.s32.totalorder %s15, 6
      %s22 = sphi 0, %s41
      %s23 = sphi 0, %s37
      %s24 = sphi 0, %s33
      %s25 = sphi 0, %s22
      %s26 = sphi 0, %s23
      %s27 = sphi 0, %s24
      %s28 = sphi 0, %s25
      %s29 = sphi 0, %s26
      %s30 = sphi 0, %s27
      %s44 = sphi 0, %s46
      %s47 = sphi 0, %s44
      %s48 = sphi 0, %s47
      %s64 = sphi 0, %s48
      %s68 = sphi 0, %s68
      %s70 = sphi 0, %s68
      %s71 = sphi 0, %s70
      %s85 = sphi 0, %s71
      %s89 = sphi 0, %s89
      %s91 = sphi 0, %s89
      %s92 = sphi 0, %s91
      %s106 = sphi 0, %s92
      %s110 = sphi 0, %s110
      %s112 = sphi 0, %s110
      %s113 = sphi 0, %s112
      %s127 = sphi 0, %s113
      %s131 = sphi 0, %s131
      %s133 = sphi 0, %s131
      %s134 = sphi 0, %s133
      %s148 = sphi 0, %s134
      %s156 = sphi 0, %s158
      %s159 = sphi 0, %s156
      %s160 = sphi 0, %s159
      %s176 = sphi 0, %s160
    $region4: #{tpu_custom_call.1} parent=1 // loop_header_branch
      %18 = sbr.rel (%p16) target = $region8
    $region5: #{tpu_custom_call.1} parent=1 // loop_body
      %s20 = ssub.s32 %s15, 1
      %s21 = ssub.s32 %s15, 2
      %s31 = sadd.s32 1, %s24
      %p32 = scmp.ge.s32.totalorder %s31, 1
      %s33 = scalar_select %p32, 0, %s31
      %s34 = sadd.s32 1, %s23
      %s35 = scalar_select %p32, %s34, %s23
      %p36 = scmp.ge.s32.totalorder %s35, 2
      %s37 = scalar_select %p36, 0, %s35
      %s38 = sadd.s32 1, %s22
      %s39 = scalar_select %p36, %s38, %s22
      %p40 = scmp.ge.s32.totalorder %s39, 2
      %s41 = scalar_select %p40, 0, %s39
      %s42 = ssub.s32 %s23, %s37
      %p43 = scmp.eq.s32.totalorder %s42, 0
      %s45 = sadd.s32 %s44, 1
      %s46 = scalar_select %p43, %s44, %s45
      %p49 = pneg %p43
      %p50 = scmp.eq.s32.totalorder %s15, 3
      %p51 = por %p49, %p50
      %p52 = scmp.ne.s32.totalorder %s44, %s47
      %p53 = scmp.eq.s32.totalorder %s15, 0
      %p54 = por %p52, %p53
      %p55 = scmp.ne.s32.totalorder %s44, %s47
      %p56 = scmp.eq.s32.totalorder %s20, 3
      %p57 = por %p55, %p56
      %p58 = scmp.ne.s32.totalorder %s47, %s48
      %p59 = scmp.eq.s32.totalorder %s20, 0
      %p60 = por %p58, %p59
      %p61 = scmp.ne.s32.totalorder %s47, %s48
      %p62 = scmp.eq.s32.totalorder %s21, 3
      %p63 = por %p61, %p62
      %p65 = scmp.ne.s32.totalorder %s48, %s64
      %p66 = scmp.eq.s32.totalorder %s21, 0
      %p67 = por %p65, %p66
      %s69 = sadd.s32 %s68, 1
      %p72 = scmp.eq.s32.totalorder %s15, 3
      %p73 = scmp.ne.s32.totalorder %s68, %s70
      %p74 = scmp.eq.s32.totalorder %s15, 0
      %p75 = por %p73, %p74
      %p76 = scmp.ne.s32.totalorder %s68, %s70
      %p77 = scmp.eq.s32.totalorder %s20, 3
      %p78 = por %p76, %p77
      %p79 = scmp.ne.s32.totalorder %s70, %s71
      %p80 = scmp.eq.s32.totalorder %s20, 0
      %p81 = por %p79, %p80
      %p82 = scmp.ne.s32.totalorder %s70, %s71
      %p83 = scmp.eq.s32.totalorder %s21, 3
      %p84 = por %p82, %p83
      %p86 = scmp.ne.s32.totalorder %s71, %s85
      %p87 = scmp.eq.s32.totalorder %s21, 0
      %p88 = por %p86, %p87
      %s90 = sadd.s32 %s89, 1
      %p93 = scmp.eq.s32.totalorder %s15, 3
      %p94 = scmp.ne.s32.totalorder %s89, %s91
      %p95 = scmp.eq.s32.totalorder %s15, 0
      %p96 = por %p94, %p95
      %p97 = scmp.ne.s32.totalorder %s89, %s91
      %p98 = scmp.eq.s32.totalorder %s20, 3
      %p99 = por %p97, %p98
      %p100 = scmp.ne.s32.totalorder %s91, %s92
      %p101 = scmp.eq.s32.totalorder %s20, 0
      %p102 = por %p100, %p101
      %p103 = scmp.ne.s32.totalorder %s91, %s92
      %p104 = scmp.eq.s32.totalorder %s21, 3
      %p105 = por %p103, %p104
      %p107 = scmp.ne.s32.totalorder %s92, %s106
      %p108 = scmp.eq.s32.totalorder %s21, 0
      %p109 = por %p107, %p108
      %s111 = sadd.s32 %s110, 1
      %p114 = scmp.eq.s32.totalorder %s15, 3
      %p115 = scmp.ne.s32.totalorder %s110, %s112
      %p116 = scmp.eq.s32.totalorder %s15, 0
      %p117 = por %p115, %p116
      %p118 = scmp.ne.s32.totalorder %s110, %s112
      %p119 = scmp.eq.s32.totalorder %s20, 3
      %p120 = por %p118, %p119
      %p121 = scmp.ne.s32.totalorder %s112, %s113
      %p122 = scmp.eq.s32.totalorder %s20, 0
      %p123 = por %p121, %p122
      %p124 = scmp.ne.s32.totalorder %s112, %s113
      %p125 = scmp.eq.s32.totalorder %s21, 3
      %p126 = por %p124, %p125
      %p128 = scmp.ne.s32.totalorder %s113, %s127
      %p129 = scmp.eq.s32.totalorder %s21, 0
      %p130 = por %p128, %p129
      %s132 = sadd.s32 %s131, 1
      %p135 = scmp.eq.s32.totalorder %s15, 3
      %p136 = scmp.ne.s32.totalorder %s131, %s133
      %p137 = scmp.eq.s32.totalorder %s15, 0
      %p138 = por %p136, %p137
      %p139 = scmp.ne.s32.totalorder %s131, %s133
      %p140 = scmp.eq.s32.totalorder %s20, 3
      %p141 = por %p139, %p140
      %p142 = scmp.ne.s32.totalorder %s133, %s134
      %p143 = scmp.eq.s32.totalorder %s20, 0
      %p144 = por %p142, %p143
      %p145 = scmp.ne.s32.totalorder %s133, %s134
      %p146 = scmp.eq.s32.totalorder %s21, 3
      %p147 = por %p145, %p146
      %p149 = scmp.ne.s32.totalorder %s134, %s148
      %p150 = scmp.eq.s32.totalorder %s21, 0
      %p151 = por %p149, %p150
      %s152 = sadd.s32 %s23, %s24
      %s153 = sadd.s32 %s37, %s33
      %s154 = ssub.s32 %s152, %s153
      %p155 = scmp.eq.s32.totalorder %s154, 0
      %s157 = sadd.s32 %s156, 1
      %s158 = scalar_select %p155, %s156, %s157
      %p161 = pneg %p155
      %p162 = scmp.eq.s32.totalorder %s15, 3
      %p163 = por %p161, %p162
      %p164 = scmp.ne.s32.totalorder %s156, %s159
      %p165 = scmp.eq.s32.totalorder %s15, 0
      %p166 = por %p164, %p165
      %p167 = scmp.ne.s32.totalorder %s156, %s159
      %p168 = scmp.eq.s32.totalorder %s20, 3
      %p169 = por %p167, %p168
      %p170 = scmp.ne.s32.totalorder %s159, %s160
      %p171 = scmp.eq.s32.totalorder %s20, 0
      %p172 = por %p170, %p171
      %p173 = scmp.ne.s32.totalorder %s159, %s160
      %p174 = scmp.eq.s32.totalorder %s21, 3
      %p175 = por %p173, %p174
      %p177 = scmp.ne.s32.totalorder %s160, %s176
      %p178 = scmp.eq.s32.totalorder %s21, 0
      %p179 = por %p177, %p178
      %p180 = scmp.le.s32.totalorder 1, %s15
      %p181 = scmp.lt.s32.totalorder %s15, 5
      %p182 = pnand %p180, %p181
      %p183 = pneg %p182
      // Predicated region
      $region9: #{tpu_custom_call.1} parent=5 // pred_check
        _
      $region10: #{tpu_custom_call.1} parent=5 // pred_check_branch
        %185 = sbr.rel (%p182) target = $region12
      $region11: #{tpu_custom_call.1} parent=5 // pred_region
        %s186 = ssub.s32 %s15, 1
        // Predicated region
        $region13: #{tpu_custom_call.1} parent=11 // pred_check
          %p187 = pneg %p81
        $region14: #{tpu_custom_call.1} parent=11 // pred_check_branch
          %189 = sbr.rel (%p187) target = $region16
        $region15: #{tpu_custom_call.1} parent=11 // pred_region
          %s191 = ssub.s32 64, 64
          %192 = vsyncadd [#allocation7], %s191
          %s194 = sshll.u32 [#allocation6], 4
          %s195 = int_to_ptr.vmem [resolvable:$true] %s194
          %197 = dma.hbm_to_vmem [thread:$0]  %s1, 64, %s195, [#allocation7]
        $region16: #{tpu_custom_call.1} parent=11 // pred_fallthru
          _
        // Predicated region
        $region17: #{tpu_custom_call.1} parent=11 // pred_check
          %p198 = pneg %p102
        $region18: #{tpu_custom_call.1} parent=11 // pred_check_branch
          %200 = sbr.rel (%p198) target = $region20
        $region19: #{tpu_custom_call.1} parent=11 // pred_region
          _
        $region20: #{tpu_custom_call.1} parent=11 // pred_fallthru
          _
        // Predicated region
        $region21: #{tpu_custom_call.1} parent=11 // pred_check
          %p201 = pneg %p123
        $region22: #{tpu_custom_call.1} parent=11 // pred_check_branch
          %203 = sbr.rel (%p201) target = $region24
        $region23: #{tpu_custom_call.1} parent=11 // pred_region
          _
        $region24: #{tpu_custom_call.1} parent=11 // pred_fallthru
          _
        // Predicated region
        $region25: #{tpu_custom_call.1} parent=11 // pred_check
          %p204 = pneg %p144
        $region26: #{tpu_custom_call.1} parent=11 // pred_check_branch
          %206 = sbr.rel (%p204) target = $region28
        $region27: #{tpu_custom_call.1} parent=11 // pred_region
          _
        $region28: #{tpu_custom_call.1} parent=11 // pred_fallthru
          _
      $region12: #{tpu_custom_call.1} parent=5 // pred_fallthru
        _
      %p207 = scmp.lt.s32.totalorder %s15, 4
      // Predicated region
      $region29: #{tpu_custom_call.1} parent=5 // pred_check
        %p208 = pneg %p207
      $region30: #{tpu_custom_call.1} parent=5 // pred_check_branch
        %210 = sbr.rel (%p208) target = $region32
      $region31: #{tpu_custom_call.1} parent=5 // pred_region
        // Predicated region
        $region33: #{tpu_custom_call.1} parent=31 // pred_check
          %p211 = pneg %p54
        $region34: #{tpu_custom_call.1} parent=31 // pred_check_branch
          %213 = sbr.rel (%p211) target = $region36
        $region35: #{tpu_custom_call.1} parent=31 // pred_region
          %s214 = sand.u32 %s44, 1
          %s215 = scalar_lea.sflag [#allocation5], %s214
          %s216 = sand.u32 %s44, 1
          %s217 = smul.addr %s216, 32
          %s218 = scalar_lea.vmem [#allocation4], %s217
          %s220 = ssub.s32 512, 512
          %221 = vsyncadd %s215, %s220
          %s222 = smul.addr %s23, 8
          %s223 = smul.addr %s222, 64
          %s224 = scalar_lea.hbm %s0, %s223
          %s225 = sshll.u32 %s218, 4
          %s226 = int_to_ptr.vmem [resolvable:$true] %s225
          %231 = dma.hbm_to_vmem [thread:$0]  %s224, 512, %s226, %s215, 64, 64, 4
        $region36: #{tpu_custom_call.1} parent=31 // pred_fallthru
          _
      $region32: #{tpu_custom_call.1} parent=5 // pred_fallthru
        _
      %p232 = scmp.le.s32.totalorder 1, %s15
      %p233 = scmp.lt.s32.totalorder %s15, 5
      %p234 = pnand %p232, %p233
      %p235 = pneg %p234
      // Predicated region
      $region37: #{tpu_custom_call.1} parent=5 // pred_check
        _
      $region38: #{tpu_custom_call.1} parent=5 // pred_check_branch
        %237 = sbr.rel (%p234) target = $region40
      $region39: #{tpu_custom_call.1} parent=5 // pred_region
        %s238 = ssub.s32 %s15, 1
        %s239 = sand.u32 %s47, 1
        %s240 = scalar_lea.sflag [#allocation5], %s239
        %s241 = sand.u32 %s47, 1
        %s242 = smul.addr %s241, 32
        %s243 = scalar_lea.vmem [#allocation4], %s242
        // Predicated region
        $region41: #{tpu_custom_call.1} parent=39 // pred_check
          %p244 = pneg %p60
        $region42: #{tpu_custom_call.1} parent=39 // pred_check_branch
          %246 = sbr.rel (%p244) target = $region44
        $region43: #{tpu_custom_call.1} parent=39 // pred_region
          %247 = dma.done %s240, 512
        $region44: #{tpu_custom_call.1} parent=39 // pred_fallthru
          _
        // Predicated region
        $region45: #{tpu_custom_call.1} parent=39 // pred_check
          %p248 = pneg %p81
        $region46: #{tpu_custom_call.1} parent=39 // pred_check_branch
          %250 = sbr.rel (%p248) target = $region48
        $region47: #{tpu_custom_call.1} parent=39 // pred_region
          %251 = dma.done [#allocation7], 64
        $region48: #{tpu_custom_call.1} parent=39 // pred_fallthru
          _
        %s252 = sand.u32 %s47, 1
        %s253 = scalar_lea.sflag [#allocation5], %s252
        %s254 = sand.u32 %s47, 1
        %s255 = smul.addr %s254, 32
        %s256 = scalar_lea.vmem [#allocation4], %s255
        %p257 = pneg %p60
        %p258 = pneg %p57
        %p259 = pneg %p81
        %p260 = pneg %p78
        %p261 = pneg %p102
        %p262 = pneg %p99
        %p263 = pneg %p123
        %p264 = pneg %p120
        %p265 = pneg %p144
        %p266 = pneg %p141
        %p267 = pneg %p172
        %p268 = pneg %p169
        %s269 = sadd.s32 %s26, %s27
        %s270 = smul.u32 8, %s269
        %p271 = scmp.lt.s32.totalorder %s270, 15
        %s272 = scalar_select %p271, %s270, 15
        %s273 = smul.addr %s272, 4
        %s274 = scalar_lea.vmem %s5, %s273
        %s275 = sadd.s32 %s26, %s27
        %s276 = smul.u32 8, %s275
        %p277 = scmp.lt.s32.totalorder %s276, 15
        %s278 = scalar_select %p277, %s276, 15
        %s279 = smul.addr %s278, 4
        %s280 = scalar_lea.vmem %s5, %s279
        %s281 = sadd.s32 %s26, %s27
        %s282 = smul.u32 8, %s281
        %p284 = scmp.eq.s32.totalorder %s25, 0
        %p285 = scmp.eq.s32.totalorder %s26, 0
        %p286 = pnand %p284, %p285
        %p287 = pneg %p286
        %p288 = scmp.eq.s32.totalorder %s27, 0
        %p289 = pnand %p287, %p288
        %p290 = pneg %p289
        // Predicated region
        $region49: #{tpu_custom_call.1} parent=39 // pred_check
          _
        $region50: #{tpu_custom_call.1} parent=39 // pred_check_branch
          %292 = sbr.rel (%p289) target = $region52
        $region51: #{tpu_custom_call.1} parent=39 // pred_region
          %vm293 = vcmask 57344
          %294 = vst.msk [vmem:[#allocation2] sm:$0x1] %vm293, 0.0
          %295 = vst.msk [vmem:[#allocation2 + $0x1] sm:$0x1] %vm293, 0.0
          %296 = vst.msk [vmem:[#allocation3] sm:$0x1] %vm293, 0.0
          %297 = vst.msk [vmem:[#allocation3 + $0x1] sm:$0x1] %vm293, 0.0
        $region52: #{tpu_custom_call.1} parent=39 // pred_fallthru
          _
        %s298 = smul.u32 %s27, 8
        %s299 = smul.addr %s298, 4
        %s300 = scalar_lea.vmem %s243, %s299 [#allocation4]
        %v301 = vld [vmem:[%s300] sm:$0xf]
        %v302 = vld [vmem:[%s300 + $0x4] sm:$0xf]
        %v303 = vld [vmem:[%s300 + $0x8] sm:$0xf]
        %v304 = vld [vmem:[%s300 + $0xc] sm:$0xf]
        %v305 = vld [vmem:[%s300 + $0x10] sm:$0xf]
        %v306 = vld [vmem:[%s300 + $0x14] sm:$0xf]
        %v307 = vld [vmem:[%s300 + $0x18] sm:$0xf]
        %v308 = vld [vmem:[%s300 + $0x1c] sm:$0xf]
        %v309 = vld [vmem:[#allocation6] sm:$0xf]
        %v318 = vunpack.c.l.b16 %v301
        %v319 = vunpack.c.l.b16 %v302
        %v320 = vunpack.c.l.b16 %v303
        %v321 = vunpack.c.l.b16 %v304
        %v322 = vunpack.c.l.b16 %v305
        %v323 = vunpack.c.l.b16 %v306
        %v324 = vunpack.c.l.b16 %v307
        %v325 = vunpack.c.l.b16 %v308
        %v326 = vpack.c.b16 %v319, %v318
        %v327 = vpack.c.b16 %v321, %v320
        %v328 = vpack.c.b16 %v323, %v322
        %v329 = vpack.c.b16 %v325, %v324
        %vm330 = vcmask 64512
        %v332 = vsel %vm330, %v326, 0
        %v335 = vsel %vm330, %v327, 0
        %v338 = vsel %vm330, %v328, 0
        %v341 = vsel %vm330, %v329, 0
        %vm343 = vcmask 1043456
        %v345 = vsel %vm343, %v309, 0
        %347 = vmatprep.subr.bf16.mxu0 0
        %348 = vmatpush1.bf16.msra.mxu0 %v345
        %349 = vmatprep.subr.bf16.mxu0 0
        %350 = vmatpush1.bf16.msra.mxu0 0
        %351 = vmatprep.subr.bf16.mxu0 0
        %352 = vmatpush1.bf16.msra.mxu0 0
        %353 = vmatprep.subr.bf16.mxu0 0
        %354 = vmatpush1.bf16.msra.mxu0 0
        %355 = vmatprep.subr.bf16.mxu0 0
        %356 = vmatpush1.bf16.msra.mxu0 0
        %357 = vmatprep.subr.bf16.mxu0 0
        %358 = vmatpush1.bf16.msra.mxu0 0
        %359 = vmatprep.subr.bf16.mxu0 0
        %360 = vmatpush1.bf16.msra.mxu0 0
        %361 = vmatprep.subr.bf16.mxu0 0
        %362 = vmatpush1.bf16.msra.mxu0 0
        %363 = vmatprep.subr.bf16.mxu0 0
        %364 = vmatpush1.bf16.msra.mxu0 0
        %365 = vmatprep.subr.bf16.mxu0 0
        %366 = vmatpush1.bf16.msra.mxu0 0
        %367 = vmatprep.subr.bf16.mxu0 0
        %368 = vmatpush1.bf16.msra.mxu0 0
        %369 = vmatprep.subr.bf16.mxu0 0
        %370 = vmatpush1.bf16.msra.mxu0 0
        %371 = vmatprep.subr.bf16.mxu0 0
        %372 = vmatpush1.bf16.msra.mxu0 0
        %373 = vmatprep.subr.bf16.mxu0 0
        %374 = vmatpush1.bf16.msra.mxu0 0
        %375 = vmatprep.subr.bf16.mxu0 0
        %376 = vmatpush1.bf16.msra.mxu0 0
        %377 = vmatprep.subr.bf16.mxu0 0
        %378 = vmatpush1.bf16.msra.mxu0 0
        %379 = vmatprep.mubr.bf16.mxu0 0
        %380 = vmatmul.mubr.bf16.gmra.mrb[0].mxu0 %v332
        %v381 = vpop.f32.mrb[0].mxu0
        %v382 = vadd.f32 0.0, %v381
        %v383 = vpop.f32.mrb[0].mxu0
        %v384 = vpop.f32.mrb[0].mxu0
        %v385 = vadd.f32 0.0, %v384
        %v386 = vpop.f32.mrb[0].mxu0
        %387 = vmatprep.mubr.bf16.mxu0 0
        %388 = vmatmul.mubr.bf16.gmra.mrb[0].mxu0 %v335
        %v389 = vpop.f32.mrb[0].mxu0
        %v390 = vadd.f32 0.0, %v389
        %v391 = vpop.f32.mrb[0].mxu0
        %v392 = vpop.f32.mrb[0].mxu0
        %v393 = vadd.f32 0.0, %v392
        %v394 = vpop.f32.mrb[0].mxu0
        %395 = vmatprep.mubr.bf16.mxu0 0
        %396 = vmatmul.mubr.bf16.gmra.mrb[0].mxu0 %v338
        %v397 = vpop.f32.mrb[0].mxu0
        %v398 = vadd.f32 0.0, %v397
        %v399 = vpop.f32.mrb[0].mxu0
        %v400 = vpop.f32.mrb[0].mxu0
        %v401 = vadd.f32 0.0, %v400
        %v402 = vpop.f32.mrb[0].mxu0
        %403 = vmatprep.mubr.bf16.mxu0 0
        %404 = vmatmul.mubr.bf16.gmra.mrb[0].mxu0 %v341
        %v405 = vpop.f32.mrb[0].mxu0
        %v406 = vadd.f32 0.0, %v405
        %v407 = vpop.f32.mrb[0].mxu0
        %v408 = vpop.f32.mrb[0].mxu0
        %v409 = vadd.f32 0.0, %v408
        %v410 = vpop.f32.mrb[0].mxu0
        %411 = vdwg.mxu0
        // Predicated region
        $region53: #{tpu_custom_call.1} parent=39 // pred_check
          %p412 = pneg %p284
        $region54: #{tpu_custom_call.1} parent=39 // pred_check_branch
          %414 = sbr.rel (%p412) target = $region56
        $region55: #{tpu_custom_call.1} parent=39 // pred_region
          %s415 = scalar_lea.vmem [#allocation2], %s26
          %v416 = vld [vmem:[%s415] sm:$0x1]
          %v417 = vsel %vm330, %v382, 0.0
          %v418 = vsel %vm330, %v385, 0.0
          %v419 = vadd.f32 %v417, %v418
          %v420 = vsel %vm330, %v390, 0.0
          %v421 = vadd.f32 %v419, %v420
          %v422 = vsel %vm330, %v393, 0.0
          %v423 = vadd.f32 %v421, %v422
          %v424 = vsel %vm330, %v398, 0.0
          %v425 = vadd.f32 %v423, %v424
          %v426 = vsel %vm330, %v401, 0.0
          %v427 = vadd.f32 %v425, %v426
          %v428 = vsel %vm330, %v406, 0.0
          %v429 = vadd.f32 %v427, %v428
          %v430 = vsel %vm330, %v409, 0.0
          %v431 = vadd.f32 %v429, %v430
          %v432 = vrot.slane %v431, 4
          %v433 = vadd.f32 %v431, %v432
          %v434 = vrot.slane %v433, 2
          %v435 = vadd.f32 %v433, %v434
          %v436 = vrot.slane %v435, 1
          %v437 = vadd.f32 %v435, %v436
          %v438 = vadd.f32 %v416, %v437
          %vm439 = vcmask 57344
          %440 = vst.msk [vmem:[%s415] sm:$0x1] %vm439, %v438
          %s441 = scalar_lea.vmem [#allocation3], %s26
          %v442 = vld [vmem:[%s441] sm:$0x1]
          %v443 = vmul.f32 %v382, %v382
          %v444 = vmul.f32 %v385, %v385
          %v445 = vmul.f32 %v390, %v390
          %v446 = vmul.f32 %v393, %v393
          %v447 = vmul.f32 %v398, %v398
          %v448 = vmul.f32 %v401, %v401
          %v449 = vmul.f32 %v406, %v406
          %v450 = vmul.f32 %v409, %v409
          %v451 = vsel %vm330, %v443, 0.0
          %v452 = vsel %vm330, %v444, 0.0
          %v453 = vadd.f32 %v451, %v452
          %v454 = vsel %vm330, %v445, 0.0
          %v455 = vadd.f32 %v453, %v454
          %v456 = vsel %vm330, %v446, 0.0
          %v457 = vadd.f32 %v455, %v456
          %v458 = vsel %vm330, %v447, 0.0
          %v459 = vadd.f32 %v457, %v458
          %v460 = vsel %vm330, %v448, 0.0
          %v461 = vadd.f32 %v459, %v460
          %v462 = vsel %vm330, %v449, 0.0
          %v463 = vadd.f32 %v461, %v462
          %v464 = vsel %vm330, %v450, 0.0
          %v465 = vadd.f32 %v463, %v464
          %v466 = vrot.slane %v465, 4
          %v467 = vadd.f32 %v465, %v466
          %v468 = vrot.slane %v467, 2
          %v469 = vadd.f32 %v467, %v468
          %v470 = vrot.slane %v469, 1
          %v471 = vadd.f32 %v469, %v470
          %v472 = vadd.f32 %v442, %v471
          %473 = vst.msk [vmem:[%s441] sm:$0x1] %vm439, %v472
        $region56: #{tpu_custom_call.1} parent=39 // pred_fallthru
          _
        %p474 = scmp.eq.s32.totalorder %s25, 1
        // Predicated region
        $region57: #{tpu_custom_call.1} parent=39 // pred_check
          %p475 = pneg %p474
        $region58: #{tpu_custom_call.1} parent=39 // pred_check_branch
          %477 = sbr.rel (%p475) target = $region60
        $region59: #{tpu_custom_call.1} parent=39 // pred_region
          %s478 = scalar_lea.vmem [#allocation2], %s26
          %v479 = vld [vmem:[%s478] sm:$0x1]
          %s480 = scalar_lea.vmem [#allocation3], %s26
          %v481 = vld [vmem:[%s480] sm:$0x1]
          %v482 = vrcp.pop 64.0
          %v483 = vmul.f32 %v479, %v482
          %v484 = vmul.f32 %v481, %v482
          %v485 = vmul.f32 %v483, %v483
          %v486 = vsub.f32 %v484, %v485
          %v487 = vmax.f32 %v486, 0.0
          %v488 = vld [vmem:[#allocation2] sm:$0x1]
          %v489 = vld [vmem:[#allocation2 + $0x1] sm:$0x1]
          %vm490 = vcmask 57344
          %v491 = vsel %vm490, %v488, 0.0
          %v492 = vsel %vm490, %v489, 0.0
          %v493 = vadd.f32 %v491, %v492
          %v494 = vld [vmem:[#allocation3] sm:$0x1]
          %v495 = vld [vmem:[#allocation3 + $0x1] sm:$0x1]
          %v496 = vsel %vm490, %v494, 0.0
          %v497 = vsel %vm490, %v495, 0.0
          %v498 = vadd.f32 %v496, %v497
          %v499 = vrcp.pop 128.0
          %v500 = vmul.f32 %v493, %v499
          %v501 = vmul.f32 %v498, %v499
          %v502 = vmul.f32 %v500, %v500
          %v503 = vsub.f32 %v501, %v502
          %v504 = vmax.f32 %v503, 0.0
          %v505 = vld [vmem:[%s4] sm:$0x1]
          %vm506 = vcmp.gt.f32.partialorder %v505, 0.5
          %v507 = vsel %vm506, %v500, %v483
          %v508 = vsel %vm506, %v504, %v487
          %v509 = vld [vmem:[%s2] sm:$0x1]
          %v510 = vadd.f32 %v508, 1e-05
          %v511 = vrsqrt.pop %v510
          %v512 = vmul.f32 %v509, %v511
          %v513 = vld [vmem:[%s3] sm:$0x1]
          %v514 = vmul.f32 %v507, %v512
          %v515 = vsub.f32 %v513, %v514
          %v517 = vlaneseq
          %v518 = vshrl.u32 %v517, 7
          %v519 = vsub.s32 0, %v518
          %v520 = vrot.slane %v512, %v519
          %v522 = vmul.f32 %v382, %v520
          %v523 = vmul.f32 %v385, %v520
          %v524 = vmul.f32 %v390, %v520
          %v525 = vmul.f32 %v393, %v520
          %v526 = vmul.f32 %v398, %v520
          %v527 = vmul.f32 %v401, %v520
          %v528 = vmul.f32 %v406, %v520
          %v529 = vmul.f32 %v409, %v520
          %v531 = vlaneseq
          %v532 = vshrl.u32 %v531, 7
          %v533 = vsub.s32 0, %v532
          %v534 = vrot.slane %v515, %v533
          %v536 = vadd.f32 %v522, %v534
          %v537 = vadd.f32 %v523, %v534
          %v538 = vadd.f32 %v524, %v534
          %v539 = vadd.f32 %v525, %v534
          %v540 = vadd.f32 %v526, %v534
          %v541 = vadd.f32 %v527, %v534
          %v542 = vadd.f32 %v528, %v534
          %v543 = vadd.f32 %v529, %v534
          %v544 = vmax.f32 %v536, 0.0
          %v545 = vmax.f32 %v537, 0.0
          %v546 = vmax.f32 %v538, 0.0
          %v547 = vmax.f32 %v539, 0.0
          %v548 = vmax.f32 %v540, 0.0
          %v549 = vmax.f32 %v541, 0.0
          %v550 = vmax.f32 %v542, 0.0
          %v551 = vmax.f32 %v543, 0.0
          %v552 = vpack.c.bf16 %v545, %v544
          %v553 = vpack.c.bf16 %v547, %v546
          %v554 = vpack.c.bf16 %v549, %v548
          %v555 = vpack.c.bf16 %v551, %v550
          %v560 = vunpack.c.l.b16 %v552
          %v561 = vunpack.c.h.b16 %v552
          %v562 = vunpack.c.l.b16 %v553
          %v563 = vunpack.c.h.b16 %v553
          %v564 = vunpack.c.l.b16 %v554
          %v565 = vunpack.c.h.b16 %v554
          %v566 = vunpack.c.l.b16 %v555
          %v567 = vunpack.c.h.b16 %v555
          %v568 = vpack.c.b16 %v560, %v560
          %v569 = vpack.c.b16 %v561, %v561
          %v570 = vpack.c.b16 %v562, %v562
          %v571 = vpack.c.b16 %v563, %v563
          %v572 = vpack.c.b16 %v564, %v564
          %v573 = vpack.c.b16 %v565, %v565
          %v574 = vpack.c.b16 %v566, %v566
          %v575 = vpack.c.b16 %v567, %v567
          %vm584 = vcmask 60416
          %585 = vst.msk [vmem:[%s280] sm:$0xf] %vm584, %v568
          %586 = vst.msk [vmem:[%s280 + $0x4] sm:$0xf] %vm584, %v569
          %587 = vst.msk [vmem:[%s280 + $0x8] sm:$0xf] %vm584, %v570
          %588 = vst.msk [vmem:[%s280 + $0xc] sm:$0xf] %vm584, %v571
          %589 = vst.msk [vmem:[%s280 + $0x10] sm:$0xf] %vm584, %v572
          %590 = vst.msk [vmem:[%s280 + $0x14] sm:$0xf] %vm584, %v573
          %591 = vst.msk [vmem:[%s280 + $0x18] sm:$0xf] %vm584, %v574
          %592 = vst.msk [vmem:[%s280 + $0x1c] sm:$0xf] %vm584, %v575
        $region60: #{tpu_custom_call.1} parent=39 // pred_fallthru
          _
        %s593 = sadd.s32 %s26, %s27
        %s594 = smul.u32 8, %s593
        %p595 = scmp.lt.s32.totalorder %s594, 15
        %s596 = scalar_select %p595, %s594, 15
        %s597 = smul.addr %s596, 4
        %s598 = scalar_lea.vmem %s5, %s597
        // Predicated region
        $region61: #{tpu_custom_call.1} parent=39 // pred_check
          %p599 = pneg %p169
        $region62: #{tpu_custom_call.1} parent=39 // pred_check_branch
          %601 = sbr.rel (%p599) target = $region64
        $region63: #{tpu_custom_call.1} parent=39 // pred_region
          %s602 = sadd.s32 %s26, %s27
          %s603 = smul.u32 8, %s602
        $region64: #{tpu_custom_call.1} parent=39 // pred_fallthru
          _
      $region40: #{tpu_custom_call.1} parent=5 // pred_fallthru
        _
      %p604 = scmp.le.s32.totalorder 2, %s15
      // Predicated region
      $region65: #{tpu_custom_call.1} parent=5 // pred_check
        %p605 = pneg %p604
      $region66: #{tpu_custom_call.1} parent=5 // pred_check_branch
        %607 = sbr.rel (%p605) target = $region68
      $region67: #{tpu_custom_call.1} parent=5 // pred_region
        %s608 = ssub.s32 %s15, 2
        // Predicated region
        $region69: #{tpu_custom_call.1} parent=67 // pred_check
          %p609 = pneg %p175
        $region70: #{tpu_custom_call.1} parent=67 // pred_check_branch
          %611 = sbr.rel (%p609) target = $region72
        $region71: #{tpu_custom_call.1} parent=67 // pred_region
          %s612 = sadd.s32 %s29, %s30
          %s613 = smul.u32 8, %s612
          %p614 = scmp.lt.s32.totalorder %s613, 15
          %s615 = scalar_select %p614, %s613, 15
          %s616 = smul.addr %s615, 4
          %s617 = scalar_lea.vmem %s5, %s616
        $region72: #{tpu_custom_call.1} parent=67 // pred_fallthru
          _
      $region68: #{tpu_custom_call.1} parent=5 // pred_fallthru
        _
    $region6: #{tpu_custom_call.1} parent=1 // loop_footer
      %s19 = sadd.s32 1, %s15
    $region7: #{tpu_custom_call.1} parent=1 // loop_footer_branch
      %14 = sbr.rel target = $region3
    $region8: #{tpu_custom_call.1} parent=1 // loop_exit
      _
    %618 = vsyncpa [#allocation5], 1
    %s619 = scalar_lea.sflag [#allocation5], 1
    %620 = vsyncpa %s619, 1
    %621 = vsyncpa [#allocation7], 1

</llo_original>
